<compile_context>
chip_gen: v7x
topology: tpu7x:2x2x1
jax: 0.10.0
libtpu: 0.0.40
codegen_flags: <defaults>
</compile_context>

<pallas_src>
import functools

import jax
import jax.numpy as jnp
from jax import lax
from jax.experimental import pallas as pl
from jax.experimental.pallas import tpu as pltpu


def quantizer_kernel(x_ref, w_ref, w2_ref, q_ref, idx_ref, sqerr_ref):
    """One (D, S) channels-by-spatial tile.

    x_ref    : (D, S)   input tile (NCHW-native: channels on sublanes, spatial on lanes)
    w_ref    : (K, D)   full codebook (resident: constant index_map)
    w2_ref   : (K, 1)   precomputed |w_k|^2 (resident)
    q_ref    : (D, S)   quantized output tile (already NCHW layout)
    idx_ref  : (1, S)   int32 codebook indices (lane-dense)
    sqerr_ref: (1, S)   per-position sum_d (q - x)^2 partials (lane-dense)
    """
    x = x_ref[...].astype(jnp.float32)          # (D, S)
    w = w_ref[...].astype(jnp.float32)          # (K, D)
    w2 = w2_ref[...].astype(jnp.float32)        # (K, 1)

    # scores[k, s] = |w_k|^2 - 2 w_k . x_s  (same argmin as the full distance)
    wx = lax.dot_general(w, x, (((1,), (0,)), ((), ())),
                         preferred_element_type=jnp.float32)        # (K, S)
    scores = w2 - 2.0 * wx                                          # (K, S)

    k = scores.shape[0]
    min_s = jnp.min(scores, axis=0, keepdims=True)                  # (1, S)
    iota_k = lax.broadcasted_iota(jnp.int32, scores.shape, 0)       # (K, S)
    idx = jnp.min(jnp.where(scores == min_s, iota_k, k),
                  axis=0, keepdims=True)                            # (1, S)

    # one-hot gather of codebook rows via MXU: q = W^T @ onehot -> (D, S)
    onehot = (iota_k == idx).astype(jnp.float32)                    # (K, S)
    q = lax.dot_general(w, onehot, (((0,), (0,)), ((), ())),
                        preferred_element_type=jnp.float32)         # (D, S)

    q_ref[...] = q.astype(q_ref.dtype)
    idx_ref[...] = idx.astype(jnp.int32)

    diff = q - x
    sqerr_ref[...] = jnp.sum(diff * diff, axis=0, keepdims=True)    # (1, S)


def _round_up(x, m):
    return (x + m - 1) // m * m


def _pick_spatial_tile(hw, ts_max):
    """Largest 128-multiple tile <= ts_max that divides hw; else pad."""
    ts_max = max(128, (ts_max // 128) * 128)
    upper = min(ts_max, (hw // 128) * 128)
    for t in range(upper, 0, -128):
        if hw % t == 0:
            return t, hw                    # no padding needed
    t = min(ts_max, _round_up(hw, 128))     # fallback: pad spatial axis
    return t, _round_up(hw, t)


@functools.partial(jax.jit, static_argnames=("commitment_cost", "ts_max"))
def quantizer_forward(x, weight, commitment_cost=0.25, ts_max=2048):
    """x: (b, c, h, w) NCHW with c == embed_dim; weight: (n_embed, embed_dim)."""
    b, c, h, w_sp = x.shape
    n_embed, embed_dim = weight.shape
    assert c == embed_dim

    hw = h * w_sp
    ts, hw_pad = _pick_spatial_tile(hw, ts_max)
    n_s = hw_pad // ts

    # NCHW -> (B, D, H*W): metadata-only reshape, no transpose / data movement.
    x_r = x.reshape(b, embed_dim, hw)
    if hw_pad != hw:
        x_r = jnp.pad(x_r, ((0, 0), (0, 0), (0, hw_pad - hw)))

    # hoist |w_k|^2 out of the kernel (codebook block is resident anyway)
    w2 = jnp.sum(weight.astype(jnp.float32) ** 2, axis=1, keepdims=True)  # (K, 1)

    q_r, idx_r, sqerr = pl.pallas_call(
        quantizer_kernel,
        out_shape=(
            jax.ShapeDtypeStruct((b, embed_dim, hw_pad), x.dtype),
            jax.ShapeDtypeStruct((b, 1, hw_pad), jnp.int32),
            jax.ShapeDtypeStruct((b, 1, hw_pad), jnp.float32),
        ),
        grid_spec=pltpu.PrefetchScalarGridSpec(
            num_scalar_prefetch=0,
            grid=(b, n_s),
            in_specs=[
                pl.BlockSpec((None, embed_dim, ts), lambda bi, si: (bi, 0, si)),
                pl.BlockSpec((n_embed, embed_dim), lambda bi, si: (0, 0)),
                pl.BlockSpec((n_embed, 1), lambda bi, si: (0, 0)),
            ],
            out_specs=[
                pl.BlockSpec((None, embed_dim, ts), lambda bi, si: (bi, 0, si)),
                pl.BlockSpec((None, 1, ts), lambda bi, si: (bi, 0, si)),
                pl.BlockSpec((None, 1, ts), lambda bi, si: (bi, 0, si)),
            ],
        ),
        compiler_params=pltpu.CompilerParams(
            dimension_semantics=("parallel", "parallel")),
    )(x_r, weight, w2)

    # (B, D, HW) -> NCHW (free reshape); drop spatial padding if any.
    quantized = q_r[:, :, :hw].reshape(b, embed_dim, h, w_sp)
    embed_idx = idx_r[:, 0, :hw].reshape(b, h, w_sp)
    sq_sum = jnp.sum(sqerr[:, 0, :hw])
    latent_loss = commitment_cost * sq_sum / x.size

    # straight-through: (quantized - x).detach() + x == quantized numerically
    quantized_st = quantized
    return quantized_st, embed_idx, latent_loss


def quantizer_reference(x, weight, commitment_cost=0.25):
    b, c, h, w_sp = x.shape
    n_embed, embed_dim = weight.shape
    flat = jnp.transpose(x, (0, 2, 3, 1)).reshape(-1, embed_dim)
    dist = (jnp.sum(flat ** 2, axis=1, keepdims=True)
            - 2.0 * flat @ weight.T
            + jnp.sum(weight.T ** 2, axis=0, keepdims=True))
    idx = jnp.argmax(-dist, axis=1)
    quantized = jnp.transpose(weight[idx].reshape(b, h, w_sp, embed_dim),
                              (0, 3, 1, 2))
    loss = commitment_cost * jnp.mean((quantized - x) ** 2)
    return quantized, idx.reshape(b, h, w_sp), loss


if __name__ == "__main__":
    # module hyper-parameters (synthetic, deterministic init)
    n_embed, embed_dim = 64, 32
    b, h, w_sp = 2, 16, 16

    key = jax.random.PRNGKey(0)
    k_w, k_x = jax.random.split(key)
    # nn.Embedding default init: N(0, 1)
    weight = jax.random.normal(k_w, (n_embed, embed_dim), dtype=jnp.float32)
    x = jax.random.normal(k_x, (b, embed_dim, h, w_sp), dtype=jnp.float32)

    q_st, embed_idx, latent_loss = quantizer_forward(x, weight)
    jax.block_until_ready((q_st, embed_idx, latent_loss))

    q_ref, idx_ref, loss_ref = quantizer_reference(x, weight)
    assert q_st.shape == (b, embed_dim, h, w_sp)
    assert embed_idx.shape == (b, h, w_sp)
    assert jnp.all(embed_idx == idx_ref)
    assert jnp.allclose(q_st, q_ref, atol=1e-5, rtol=1e-5)
    assert jnp.allclose(latent_loss, loss_ref, atol=1e-5, rtol=1e-5)

    print("KERNEL_OK")
</pallas_src>

<mosaic_0001>
module attributes {stable_mosaic.version = 11 : i64} {
  func.func @quantizer_kernel(%arg0: i32, %arg1: i32, %arg2: memref<1x32x256xf32, #tpu.memory_space<vmem>>, %arg3: memref<64x32xf32, #tpu.memory_space<vmem>>, %arg4: memref<64x1xf32, #tpu.memory_space<vmem>>, %arg5: memref<1x32x256xf32, #tpu.memory_space<vmem>>, %arg6: memref<1x1x256xi32, #tpu.memory_space<vmem>>, %arg7: memref<1x1x256xf32, #tpu.memory_space<vmem>>) attributes {dimension_semantics = [#tpu.dimension_semantics<parallel>, #tpu.dimension_semantics<parallel>], iteration_bounds = array<i64: 2, 1>, scalar_prefetch = 0 : i64, scratch_operands = 0 : i64, tpu.core_type = #tpu.core_type<tc>, window_params = [{transform_indices = @transform_0, window_bounds = array<i64: 1, 32, 256>}, {pipeline_mode = #tpu.pipeline_mode<synchronous>, transform_indices = @transform_1, window_bounds = array<i64: 64, 32>}, {pipeline_mode = #tpu.pipeline_mode<synchronous>, transform_indices = @transform_2, window_bounds = array<i64: 64, 1>}, {transform_indices = @transform_3, window_bounds = array<i64: 1, 32, 256>}, {transform_indices = @transform_4, window_bounds = array<i64: 1, 1, 256>}, {transform_indices = @transform_5, window_bounds = array<i64: 1, 1, 256>}]} {
    %c0 = arith.constant 0 : index
    %c0_0 = arith.constant 0 : index
    %c0_1 = arith.constant 0 : index
    %0 = vector.load %arg2[%c0, %c0_0, %c0_1] : memref<1x32x256xf32, #tpu.memory_space<vmem>>, vector<1x32x256xf32>
    %1 = vector.shape_cast %0 : vector<1x32x256xf32> to vector<32x256xf32>
    %c0_2 = arith.constant 0 : index
    %c0_3 = arith.constant 0 : index
    %2 = vector.load %arg3[%c0_2, %c0_3] : memref<64x32xf32, #tpu.memory_space<vmem>>, vector<64x32xf32>
    %c0_4 = arith.constant 0 : index
    %c0_5 = arith.constant 0 : index
    %3 = vector.load %arg4[%c0_4, %c0_5] : memref<64x1xf32, #tpu.memory_space<vmem>>, vector<64x1xf32>
    %cst = arith.constant dense<0.000000e+00> : vector<64x256xf32>
    %4 = tpu.matmul %2, %1, %cst {dimension_numbers = #tpu.dot_dimension_numbers<[1], [0], [0], [1], [0, 0, 1, 1], [], []>} : vector<64x32xf32>, vector<32x256xf32>, vector<64x256xf32> -> vector<64x256xf32>
    %cst_6 = arith.constant 2.000000e+00 : f32
    %5 = vector.broadcast %cst_6 : f32 to vector<64x256xf32>
    %6 = arith.mulf %5, %4 : vector<64x256xf32>
    %7 = vector.broadcast %3 : vector<64x1xf32> to vector<64x256xf32>
    %8 = arith.subf %7, %6 : vector<64x256xf32>
    %cst_7 = arith.constant dense<0x7F800000> : vector<256xf32>
    %9 = vector.multi_reduction <minimumf>, %8, %cst_7 [0] : vector<64x256xf32> to vector<256xf32>
    %10 = vector.shape_cast %9 : vector<256xf32> to vector<1x256xf32>
    %11 = tpu.iota {dimensions = array<i32: 0>} : vector<64x256xi32>
    %12 = vector.broadcast %10 : vector<1x256xf32> to vector<64x256xf32>
    %13 = arith.cmpf oeq, %8, %12 : vector<64x256xf32>
    %c64_i32 = arith.constant 64 : i32
    %14 = vector.broadcast %c64_i32 : i32 to vector<64x256xi32>
    %15 = arith.select %13, %11, %14 : vector<64x256xi1>, vector<64x256xi32>
    %cst_8 = arith.constant dense<2147483647> : vector<256xi32>
    %16 = vector.multi_reduction <minsi>, %15, %cst_8 [0] : vector<64x256xi32> to vector<256xi32>
    %17 = vector.shape_cast %16 : vector<256xi32> to vector<1x256xi32>
    %18 = vector.broadcast %17 : vector<1x256xi32> to vector<64x256xi32>
    %19 = arith.cmpi eq, %11, %18 : vector<64x256xi32>
    %20 = arith.extui %19 : vector<64x256xi1> to vector<64x256xi32>
    %21 = arith.sitofp %20 : vector<64x256xi32> to vector<64x256xf32>
    %cst_9 = arith.constant dense<0.000000e+00> : vector<32x256xf32>
    %22 = tpu.matmul %2, %21, %cst_9 {dimension_numbers = #tpu.dot_dimension_numbers<[0], [0], [1], [1], [0, 1, 1, 1], [], []>} : vector<64x32xf32>, vector<64x256xf32>, vector<32x256xf32> -> vector<32x256xf32>
    %c0_10 = arith.constant 0 : index
    %c0_11 = arith.constant 0 : index
    %c0_12 = arith.constant 0 : index
    %23 = vector.load %arg5[%c0_10, %c0_11, %c0_12] : memref<1x32x256xf32, #tpu.memory_space<vmem>>, vector<1x32x256xf32>
    %24 = vector.shape_cast %23 : vector<1x32x256xf32> to vector<32x256xf32>
    %25 = vector.shape_cast %22 : vector<32x256xf32> to vector<1x32x256xf32>
    tpu.vector_store %arg5[%c0_10, %c0_11, %c0_12], %25 {strides = array<i32>} : memref<1x32x256xf32, #tpu.memory_space<vmem>>, vector<1x32x256xf32>,
    %c0_13 = arith.constant 0 : index
    %c0_14 = arith.constant 0 : index
    %c0_15 = arith.constant 0 : index
    %26 = vector.load %arg6[%c0_13, %c0_14, %c0_15] : memref<1x1x256xi32, #tpu.memory_space<vmem>>, vector<1x1x256xi32>
    %27 = vector.shape_cast %26 : vector<1x1x256xi32> to vector<1x256xi32>
    %28 = vector.shape_cast %17 : vector<1x256xi32> to vector<1x1x256xi32>
    tpu.vector_store %arg6[%c0_13, %c0_14, %c0_15], %28 {strides = array<i32>} : memref<1x1x256xi32, #tpu.memory_space<vmem>>, vector<1x1x256xi32>,
    %29 = arith.subf %22, %1 : vector<32x256xf32>
    %30 = arith.mulf %29, %29 : vector<32x256xf32>
    %cst_16 = arith.constant dense<0.000000e+00> : vector<256xf32>
    %31 = vector.multi_reduction <add>, %30, %cst_16 [0] : vector<32x256xf32> to vector<256xf32>
    %32 = vector.shape_cast %31 : vector<256xf32> to vector<1x256xf32>
    %c0_17 = arith.constant 0 : index
    %c0_18 = arith.constant 0 : index
    %c0_19 = arith.constant 0 : index
    %33 = vector.load %arg7[%c0_17, %c0_18, %c0_19] : memref<1x1x256xf32, #tpu.memory_space<vmem>>, vector<1x1x256xf32>
    %34 = vector.shape_cast %33 : vector<1x1x256xf32> to vector<1x256xf32>
    %35 = vector.shape_cast %32 : vector<1x256xf32> to vector<1x1x256xf32>
    tpu.vector_store %arg7[%c0_17, %c0_18, %c0_19], %35 {strides = array<i32>} : memref<1x1x256xf32, #tpu.memory_space<vmem>>, vector<1x1x256xf32>,
    return
  }
  func.func @transform_0(%arg0: i32, %arg1: i32) -> (i32, i32, i32) {
    %c0_i32 = arith.constant 0 : i32
    %c0_i32_0 = arith.constant 0 : i32
    return %arg0, %c0_i32, %arg1 : i32, i32, i32
  }
  func.func @transform_1(%arg0: i32, %arg1: i32) -> (i32, i32) {
    %c0_i32 = arith.constant 0 : i32
    %c0_i32_0 = arith.constant 0 : i32
    %c0_i32_1 = arith.constant 0 : i32
    return %c0_i32, %c0_i32_0 : i32, i32
  }
  func.func @transform_2(%arg0: i32, %arg1: i32) -> (i32, i32) {
    %c0_i32 = arith.constant 0 : i32
    %c0_i32_0 = arith.constant 0 : i32
    %c0_i32_1 = arith.constant 0 : i32
    return %c0_i32, %c0_i32_0 : i32, i32
  }
  func.func @transform_3(%arg0: i32, %arg1: i32) -> (i32, i32, i32) {
    %c0_i32 = arith.constant 0 : i32
    %c0_i32_0 = arith.constant 0 : i32
    return %arg0, %c0_i32, %arg1 : i32, i32, i32
  }
  func.func @transform_4(%arg0: i32, %arg1: i32) -> (i32, i32, i32) {
    %c0_i32 = arith.constant 0 : i32
    %c0_i32_0 = arith.constant 0 : i32
    return %arg0, %c0_i32, %arg1 : i32, i32, i32
  }
  func.func @transform_5(%arg0: i32, %arg1: i32) -> (i32, i32, i32) {
    %c0_i32 = arith.constant 0 : i32
    %c0_i32_0 = arith.constant 0 : i32
    return %arg0, %c0_i32, %arg1 : i32, i32, i32
  }
}

</mosaic_0001>

<llo_original>
// kernel: squeeze.2
$region0: #{squeeze.2}
  %s0 = inlined_call_operand.vmem [shape: s32[2,256], index: 0, kind: input, shape index: {}]
  %s1 = inlined_call_operand.hbm [shape: s32[2,16,16], index: 1, kind: output, shape index: {}]
  $region1: #{squeeze.2} parent=0
    #allocation0 [shape = 'u8[16384]{0}', space=vmem, size = 0x4000, scoped, tag = 'operand span for operand 1']
    #allocation1 [shape = 's32[1]{0}', space=sflag, size = 0x4, scoped, tag = 'scoped memory for squeeze.2']
    #allocation2 [shape = 'u8[8192]{0}', space=vmem, size = 0x2000, scoped, tag = 'scoped mem for input reshape']
    %2 = vsyncpa [#allocation1], 0
    %s4 = sshllo.u32 0, 2
    %s5 = scalar_lea.vmem %s0, 2
    %v6 = vld [vmem:[%s5] sm:%s4]
    %s7 = scalar_lea.vmem [#allocation2], 8
    %8 = vst [vmem:[%s7] sm:%s4] %v6
    %v9 = vld [vmem:[%s0] sm:%s4]
    %10 = vst [vmem:[#allocation2] sm:%s4] %v9
    %v11 = vld [vmem:[#allocation2] sm:$0x3]
    %vm12 = vcmask 130048
    %13 = vst.msk [vmem:[#allocation0] ss:$16 sm:$0x3] %vm12, %v11
    %s14 = scalar_lea.vmem [#allocation2], 8
    %v15 = vld [vmem:[%s14] sm:$0x3]
    %vm16 = vcmask 130048
    %s17 = scalar_lea.vmem [#allocation0], 8
    %18 = vst.msk [vmem:[%s17] ss:$16 sm:$0x3] %vm16, %v15
    %v19 = vld.sshfl [vmem:[#allocation2] sm:$0xff pattern:$0x99999180]
    %20 = vrot.lane.b32.xlu0 %v19, 112
    %v21 = vpop.permute.xlu0 %20
    %vm22 = vcmask 130048
    %s23 = scalar_lea.vmem [#allocation0], 1
    %24 = vst.msk [vmem:[%s23] ss:$8 sm:$0xf] %vm22, %v21
    %v25 = vld.sshfl [vmem:[#allocation2] sm:$0xff pattern:$0x99999180]
    %26 = vrot.lane.b32.xlu0 %v25, 96
    %v27 = vpop.permute.xlu0 %26
    %vm28 = vcmask 130048
    %s29 = scalar_lea.vmem [#allocation0], 2
    %30 = vst.msk [vmem:[%s29] ss:$8 sm:$0xf] %vm28, %v27
    %v31 = vld.sshfl [vmem:[#allocation2] sm:$0xff pattern:$0x99999180]
    %32 = vrot.lane.b32.xlu0 %v31, 80
    %v33 = vpop.permute.xlu0 %32
    %vm34 = vcmask 130048
    %s35 = scalar_lea.vmem [#allocation0], 3
    %36 = vst.msk [vmem:[%s35] ss:$8 sm:$0xf] %vm34, %v33
    %v37 = vld.sshfl [vmem:[#allocation2] sm:$0xff pattern:$0x99999180]
    %38 = vrot.lane.b32.xlu0 %v37, 64
    %v39 = vpop.permute.xlu0 %38
    %vm40 = vcmask 130048
    %s41 = scalar_lea.vmem [#allocation0], 4
    %42 = vst.msk [vmem:[%s41] ss:$8 sm:$0xf] %vm40, %v39
    %v43 = vld.sshfl [vmem:[#allocation2] sm:$0xff pattern:$0x99999180]
    %44 = vrot.lane.b32.xlu0 %v43, 48
    %v45 = vpop.permute.xlu0 %44
    %vm46 = vcmask 130048
    %s47 = scalar_lea.vmem [#allocation0], 5
    %48 = vst.msk [vmem:[%s47] ss:$8 sm:$0xf] %vm46, %v45
    %v49 = vld.sshfl [vmem:[#allocation2] sm:$0xff pattern:$0x99999180]
    %50 = vrot.lane.b32.xlu0 %v49, 32
    %v51 = vpop.permute.xlu0 %50
    %vm52 = vcmask 130048
    %s53 = scalar_lea.vmem [#allocation0], 6
    %54 = vst.msk [vmem:[%s53] ss:$8 sm:$0xf] %vm52, %v51
    %v55 = vld.sshfl [vmem:[#allocation2] sm:$0xff pattern:$0x99999180]
    %56 = vrot.lane.b32.xlu0 %v55, 16
    %v57 = vpop.permute.xlu0 %56
    %vm58 = vcmask 130048
    %s59 = scalar_lea.vmem [#allocation0], 7
    %60 = vst.msk [vmem:[%s59] ss:$8 sm:$0xf] %vm58, %v57
    %s62 = ssub.s32 512, 512
    %63 = vsyncadd [#allocation1], %s62
    %s65 = sshll.u32 [#allocation0], 4
    %s66 = int_to_ptr.vmem [resolvable:$true] %s65
    %68 = dma.vmem_to_hbm [thread:$0]  %s66, 512, %s1, [#allocation1]
    %69 = dma.done [#allocation1], 512
    %70 = vsyncpa [#allocation1], 1

// kernel: quantizer_forward.1
$region0: #{quantizer_forward.1}
  #allocation0 [shape = 'u32[]', space=smem, size = 0x4, offset = 0x4, fixed_abs, tag = 'smem constant byte address 0x4 - core index']
  #allocation1 [shape = 'u32[144,128]{1,0:T(1,128)}', space=vmem, size = 0x12000, scoped, tag = 'internal scratch']
  %s0 = inlined_call_operand.vmem [shape: f32[2,32,256], index: 0, kind: input, shape index: {}]
  %s1 = inlined_call_operand.vmem [shape: f32[64,32], index: 1, kind: input, shape index: {}]
  %s2 = inlined_call_operand.vmem [shape: f32[64,1], index: 2, kind: input, shape index: {}]
  %s3 = inlined_call_operand.vmem [shape: f32[2,32,256], index: 3, kind: output, shape index: {0}]
  %s4 = inlined_call_operand.vmem [shape: s32[2,1,256], index: 4, kind: output, shape index: {1}]
  %s5 = inlined_call_operand.vmem [shape: f32[2,1,256], index: 5, kind: output, shape index: {2}]
  %6 = xla_tuple %s3, %s4, %s5
  %s7 = sld [smem:[#allocation0]]
  $region61: #{quantizer_forward.1} parent=0
    _
  %s9 = ssub.s32 1, %s7
  %s10 = scalar_select 0, %s9, %s7
  loop: start=0, step=1, limit=4
  $region2: #{quantizer_forward.1} parent=0 // loop_pre_header
    _
  $region3: #{quantizer_forward.1} parent=0 // loop_header
    %s12 = sphi 0, %s16
    %p13 = scmp.ge.s32.totalorder %s12, 4
    %s19 = sphi 0, %s31
    %s20 = sphi 0, %s27
    %s21 = sphi 0, %s19
    %s22 = sphi 0, %s20
    %s23 = sphi 0, %s21
    %s24 = sphi 0, %s22
    %s36 = sphi 0, %s38
    %s39 = sphi 0, %s36
    %s40 = sphi 0, %s39
    %s56 = sphi 0, %s40
    %s60 = sphi 0, %s60
    %s62 = sphi 0, %s60
    %s63 = sphi 0, %s62
    %s77 = sphi 0, %s63
    %s81 = sphi 0, %s81
    %s83 = sphi 0, %s81
    %s84 = sphi 0, %s83
    %s98 = sphi 0, %s84
    %s106 = sphi 0, %s108
    %s109 = sphi 0, %s106
    %s110 = sphi 0, %s109
    %s126 = sphi 0, %s110
    %s134 = sphi 0, %s136
    %s137 = sphi 0, %s134
    %s138 = sphi 0, %s137
    %s154 = sphi 0, %s138
    %s162 = sphi 0, %s164
    %s165 = sphi 0, %s162
    %s166 = sphi 0, %s165
    %s182 = sphi 0, %s166
  $region4: #{quantizer_forward.1} parent=0 // loop_header_branch
    %15 = sbr.rel (%p13) target = $region8
  $region5: #{quantizer_forward.1} parent=0 // loop_body
    %s17 = ssub.s32 %s12, 1
    %s18 = ssub.s32 %s12, 2
    %s25 = sadd.s32 1, %s20
    %p26 = scmp.ge.s32.totalorder %s25, 1
    %s27 = scalar_select %p26, 0, %s25
    %s28 = sadd.s32 1, %s19
    %s29 = scalar_select %p26, %s28, %s19
    %p30 = scmp.ge.s32.totalorder %s29, 2
    %s31 = scalar_select %p30, 0, %s29
    %s32 = ssub.s32 %s19, %s31
    %s33 = ssub.s32 %s20, %s27
    %s34 = sor.u32 %s32, %s33
    %p35 = scmp.eq.s32.totalorder %s34, 0
    %s37 = sadd.s32 %s36, 1
    %s38 = scalar_select %p35, %s36, %s37
    %p41 = pneg %p35
    %p42 = scmp.eq.s32.totalorder %s12, 1
    %p43 = por %p41, %p42
    %p44 = scmp.ne.s32.totalorder %s36, %s39
    %p45 = scmp.eq.s32.totalorder %s12, 0
    %p46 = por %p44, %p45
    %p47 = scmp.ne.s32.totalorder %s36, %s39
    %p48 = scmp.eq.s32.totalorder %s17, 1
    %p49 = por %p47, %p48
    %p50 = scmp.ne.s32.totalorder %s39, %s40
    %p51 = scmp.eq.s32.totalorder %s17, 0
    %p52 = por %p50, %p51
    %p53 = scmp.ne.s32.totalorder %s39, %s40
    %p54 = scmp.eq.s32.totalorder %s18, 1
    %p55 = por %p53, %p54
    %p57 = scmp.ne.s32.totalorder %s40, %s56
    %p58 = scmp.eq.s32.totalorder %s18, 0
    %p59 = por %p57, %p58
    %s61 = sadd.s32 %s60, 1
    %p64 = scmp.eq.s32.totalorder %s12, 1
    %p65 = scmp.ne.s32.totalorder %s60, %s62
    %p66 = scmp.eq.s32.totalorder %s12, 0
    %p67 = por %p65, %p66
    %p68 = scmp.ne.s32.totalorder %s60, %s62
    %p69 = scmp.eq.s32.totalorder %s17, 1
    %p70 = por %p68, %p69
    %p71 = scmp.ne.s32.totalorder %s62, %s63
    %p72 = scmp.eq.s32.totalorder %s17, 0
    %p73 = por %p71, %p72
    %p74 = scmp.ne.s32.totalorder %s62, %s63
    %p75 = scmp.eq.s32.totalorder %s18, 1
    %p76 = por %p74, %p75
    %p78 = scmp.ne.s32.totalorder %s63, %s77
    %p79 = scmp.eq.s32.totalorder %s18, 0
    %p80 = por %p78, %p79
    %s82 = sadd.s32 %s81, 1
    %p85 = scmp.eq.s32.totalorder %s12, 1
    %p86 = scmp.ne.s32.totalorder %s81, %s83
    %p87 = scmp.eq.s32.totalorder %s12, 0
    %p88 = por %p86, %p87
    %p89 = scmp.ne.s32.totalorder %s81, %s83
    %p90 = scmp.eq.s32.totalorder %s17, 1
    %p91 = por %p89, %p90
    %p92 = scmp.ne.s32.totalorder %s83, %s84
    %p93 = scmp.eq.s32.totalorder %s17, 0
    %p94 = por %p92, %p93
    %p95 = scmp.ne.s32.totalorder %s83, %s84
    %p96 = scmp.eq.s32.totalorder %s18, 1
    %p97 = por %p95, %p96
    %p99 = scmp.ne.s32.totalorder %s84, %s98
    %p100 = scmp.eq.s32.totalorder %s18, 0
    %p101 = por %p99, %p100
    %s102 = ssub.s32 %s19, %s31
    %s103 = ssub.s32 %s20, %s27
    %s104 = sor.u32 %s102, %s103
    %p105 = scmp.eq.s32.totalorder %s104, 0
    %s107 = sadd.s32 %s106, 1
    %s108 = scalar_select %p105, %s106, %s107
    %p111 = pneg %p105
    %p112 = scmp.eq.s32.totalorder %s12, 1
    %p113 = por %p111, %p112
    %p114 = scmp.ne.s32.totalorder %s106, %s109
    %p115 = scmp.eq.s32.totalorder %s12, 0
    %p116 = por %p114, %p115
    %p117 = scmp.ne.s32.totalorder %s106, %s109
    %p118 = scmp.eq.s32.totalorder %s17, 1
    %p119 = por %p117, %p118
    %p120 = scmp.ne.s32.totalorder %s109, %s110
    %p121 = scmp.eq.s32.totalorder %s17, 0
    %p122 = por %p120, %p121
    %p123 = scmp.ne.s32.totalorder %s109, %s110
    %p124 = scmp.eq.s32.totalorder %s18, 1
    %p125 = por %p123, %p124
    %p127 = scmp.ne.s32.totalorder %s110, %s126
    %p128 = scmp.eq.s32.totalorder %s18, 0
    %p129 = por %p127, %p128
    %s130 = ssub.s32 %s19, %s31
    %s131 = ssub.s32 %s20, %s27
    %s132 = sor.u32 %s130, %s131
    %p133 = scmp.eq.s32.totalorder %s132, 0
    %s135 = sadd.s32 %s134, 1
    %s136 = scalar_select %p133, %s134, %s135
    %p139 = pneg %p133
    %p140 = scmp.eq.s32.totalorder %s12, 1
    %p141 = por %p139, %p140
    %p142 = scmp.ne.s32.totalorder %s134, %s137
    %p143 = scmp.eq.s32.totalorder %s12, 0
    %p144 = por %p142, %p143
    %p145 = scmp.ne.s32.totalorder %s134, %s137
    %p146 = scmp.eq.s32.totalorder %s17, 1
    %p147 = por %p145, %p146
    %p148 = scmp.ne.s32.totalorder %s137, %s138
    %p149 = scmp.eq.s32.totalorder %s17, 0
    %p150 = por %p148, %p149
    %p151 = scmp.ne.s32.totalorder %s137, %s138
    %p152 = scmp.eq.s32.totalorder %s18, 1
    %p153 = por %p151, %p152
    %p155 = scmp.ne.s32.totalorder %s138, %s154
    %p156 = scmp.eq.s32.totalorder %s18, 0
    %p157 = por %p155, %p156
    %s158 = ssub.s32 %s19, %s31
    %s159 = ssub.s32 %s20, %s27
    %s160 = sor.u32 %s158, %s159
    %p161 = scmp.eq.s32.totalorder %s160, 0
    %s163 = sadd.s32 %s162, 1
    %s164 = scalar_select %p161, %s162, %s163
    %p167 = pneg %p161
    %p168 = scmp.eq.s32.totalorder %s12, 1
    %p169 = por %p167, %p168
    %p170 = scmp.ne.s32.totalorder %s162, %s165
    %p171 = scmp.eq.s32.totalorder %s12, 0
    %p172 = por %p170, %p171
    %p173 = scmp.ne.s32.totalorder %s162, %s165
    %p174 = scmp.eq.s32.totalorder %s17, 1
    %p175 = por %p173, %p174
    %p176 = scmp.ne.s32.totalorder %s165, %s166
    %p177 = scmp.eq.s32.totalorder %s17, 0
    %p178 = por %p176, %p177
    %p179 = scmp.ne.s32.totalorder %s165, %s166
    %p180 = scmp.eq.s32.totalorder %s18, 1
    %p181 = por %p179, %p180
    %p183 = scmp.ne.s32.totalorder %s166, %s182
    %p184 = scmp.eq.s32.totalorder %s18, 0
    %p185 = por %p183, %p184
    %p186 = scmp.le.s32.totalorder 1, %s12
    %p187 = scmp.lt.s32.totalorder %s12, 3
    %p188 = pnand %p186, %p187
    %p189 = pneg %p188
    // Predicated region
    $region9: #{quantizer_forward.1} parent=5 // pred_check
      _
    $region10: #{quantizer_forward.1} parent=5 // pred_check_branch
      %191 = sbr.rel (%p188) target = $region12
    $region11: #{quantizer_forward.1} parent=5 // pred_region
      %s192 = ssub.s32 %s12, 1
      // Predicated region
      $region13: #{quantizer_forward.1} parent=11 // pred_check
        %p193 = pneg %p73
      $region14: #{quantizer_forward.1} parent=11 // pred_check_branch
        %195 = sbr.rel (%p193) target = $region16
      $region15: #{quantizer_forward.1} parent=11 // pred_region
        _
      $region16: #{quantizer_forward.1} parent=11 // pred_fallthru
        _
      // Predicated region
      $region17: #{quantizer_forward.1} parent=11 // pred_check
        %p196 = pneg %p94
      $region18: #{quantizer_forward.1} parent=11 // pred_check_branch
        %198 = sbr.rel (%p196) target = $region20
      $region19: #{quantizer_forward.1} parent=11 // pred_region
        _
      $region20: #{quantizer_forward.1} parent=11 // pred_fallthru
        _
    $region12: #{quantizer_forward.1} parent=5 // pred_fallthru
      _
    %p199 = scmp.lt.s32.totalorder %s12, 2
    // Predicated region
    $region21: #{quantizer_forward.1} parent=5 // pred_check
      %p200 = pneg %p199
    $region22: #{quantizer_forward.1} parent=5 // pred_check_branch
      %202 = sbr.rel (%p200) target = $region24
    $region23: #{quantizer_forward.1} parent=5 // pred_region
      // Predicated region
      $region25: #{quantizer_forward.1} parent=23 // pred_check
        %p203 = pneg %p46
      $region26: #{quantizer_forward.1} parent=23 // pred_check_branch
        %205 = sbr.rel (%p203) target = $region28
      $region27: #{quantizer_forward.1} parent=23 // pred_region
        %s206 = smul.u32 2, %s20
        %p207 = scmp.lt.s32.totalorder %s19, 1
        %s208 = scalar_select %p207, %s19, 1
        %p209 = scmp.lt.s32.totalorder %s206, 1
        %s210 = scalar_select %p209, %s206, 1
        %s211 = smul.addr %s208, 8
        %s212 = sadd.s32 %s210, %s211
        %s213 = smul.addr %s212, 8
        %s214 = scalar_lea.vmem %s0, %s213
        %s215 = smul.u32 2, %s20
      $region28: #{quantizer_forward.1} parent=23 // pred_fallthru
        _
    $region24: #{quantizer_forward.1} parent=5 // pred_fallthru
      _
    %p216 = scmp.le.s32.totalorder 1, %s12
    %p217 = scmp.lt.s32.totalorder %s12, 3
    %p218 = pnand %p216, %p217
    %p219 = pneg %p218
    // Predicated region
    $region29: #{quantizer_forward.1} parent=5 // pred_check
      _
    $region30: #{quantizer_forward.1} parent=5 // pred_check_branch
      %221 = sbr.rel (%p218) target = $region32
    $region31: #{quantizer_forward.1} parent=5 // pred_region
      %s222 = ssub.s32 %s12, 1
      %s223 = smul.u32 2, %s22
      %p224 = scmp.lt.s32.totalorder %s21, 1
      %s225 = scalar_select %p224, %s21, 1
      %p226 = scmp.lt.s32.totalorder %s223, 1
      %s227 = scalar_select %p226, %s223, 1
      %s228 = smul.addr %s225, 8
      %s229 = sadd.s32 %s227, %s228
      %s230 = smul.addr %s229, 8
      %s231 = scalar_lea.vmem %s0, %s230
      %p232 = pneg %p52
      %p233 = pneg %p49
      %p234 = pneg %p73
      %p235 = pneg %p70
      %p236 = pneg %p94
      %p237 = pneg %p91
      %p238 = pneg %p122
      %p239 = pneg %p119
      %s240 = smul.u32 2, %s22
      %p241 = scmp.lt.s32.totalorder %s21, 1
      %s242 = scalar_select %p241, %s21, 1
      %p243 = scmp.lt.s32.totalorder %s240, 1
      %s244 = scalar_select %p243, %s240, 1
      %s245 = smul.addr %s242, 8
      %s246 = sadd.s32 %s244, %s245
      %s247 = smul.addr %s246, 8
      %s248 = scalar_lea.vmem %s3, %s247
      %p249 = pneg %p150
      %p250 = pneg %p147
      %s251 = smul.u32 2, %s22
      %p252 = scmp.lt.s32.totalorder %s21, 1
      %s253 = scalar_select %p252, %s21, 1
      %p254 = scmp.lt.s32.totalorder %s251, 1
      %s255 = scalar_select %p254, %s251, 1
      %s256 = smul.addr %s253, 2
      %s257 = sadd.s32 %s255, %s256
      %s258 = scalar_lea.vmem %s4, %s257
      %p259 = pneg %p178
      %p260 = pneg %p175
      %s261 = smul.u32 2, %s22
      %p262 = scmp.lt.s32.totalorder %s21, 1
      %s263 = scalar_select %p262, %s21, 1
      %p264 = scmp.lt.s32.totalorder %s261, 1
      %s265 = scalar_select %p264, %s261, 1
      %s266 = smul.addr %s263, 2
      %s267 = sadd.s32 %s265, %s266
      %s268 = scalar_lea.vmem %s5, %s267
      %s269 = smul.u32 2, %s22
      %p270 = scmp.lt.s32.totalorder %s21, 1
      %s271 = scalar_select %p270, %s21, 1
      %p272 = scmp.lt.s32.totalorder %s269, 1
      %s273 = scalar_select %p272, %s269, 1
      %s274 = smul.addr %s271, 8
      %s275 = sadd.s32 %s273, %s274
      %s276 = smul.addr %s275, 8
      %s277 = scalar_lea.vmem %s0, %s276
      %s278 = smul.u32 2, %s22
      %s279 = smul.u32 2, %s22
      %p280 = scmp.lt.s32.totalorder %s21, 1
      %s281 = scalar_select %p280, %s21, 1
      %p282 = scmp.lt.s32.totalorder %s279, 1
      %s283 = scalar_select %p282, %s279, 1
      %s284 = smul.addr %s281, 8
      %s285 = sadd.s32 %s283, %s284
      %s286 = smul.addr %s285, 8
      %s287 = scalar_lea.vmem %s3, %s286
      %s288 = smul.u32 2, %s22
      %s289 = smul.u32 2, %s22
      %p290 = scmp.lt.s32.totalorder %s21, 1
      %s291 = scalar_select %p290, %s21, 1
      %p292 = scmp.lt.s32.totalorder %s289, 1
      %s293 = scalar_select %p292, %s289, 1
      %s294 = smul.addr %s291, 2
      %s295 = sadd.s32 %s293, %s294
      %s296 = scalar_lea.vmem %s4, %s295
      %s297 = smul.u32 2, %s22
      %s298 = smul.u32 2, %s22
      %p299 = scmp.lt.s32.totalorder %s21, 1
      %s300 = scalar_select %p299, %s21, 1
      %p301 = scmp.lt.s32.totalorder %s298, 1
      %s302 = scalar_select %p301, %s298, 1
      %s303 = smul.addr %s300, 2
      %s304 = sadd.s32 %s302, %s303
      %s305 = scalar_lea.vmem %s5, %s304
      %s306 = smul.u32 2, %s22
      %v307 = vld [vmem:[%s277] sm:$0xff]
      %v308 = vld [vmem:[%s277 + $0x8] sm:$0xff]
      %v309 = vld [vmem:[%s277 + $0x10] sm:$0xff]
      %v310 = vld [vmem:[%s277 + $0x18] sm:$0xff]
      %v311 = vld [vmem:[%s277 + $0x20] sm:$0xff]
      %v312 = vld [vmem:[%s277 + $0x28] sm:$0xff]
      %v313 = vld [vmem:[%s277 + $0x30] sm:$0xff]
      %v314 = vld [vmem:[%s277 + $0x38] sm:$0xff]
      %v315 = vld [vmem:[%s1] sm:$0xff]
      %v316 = vld [vmem:[%s1 + $0x8] sm:$0xff]
      %v317 = vld [vmem:[%s1 + $0x10] sm:$0xff]
      %v318 = vld [vmem:[%s1 + $0x18] sm:$0xff]
      %v319 = vld [vmem:[%s1 + $0x20] sm:$0xff]
      %v320 = vld [vmem:[%s1 + $0x28] sm:$0xff]
      %v321 = vld [vmem:[%s1 + $0x30] sm:$0xff]
      %v322 = vld [vmem:[%s1 + $0x38] sm:$0xff]
      %v323 = vld [vmem:[%s2] sm:$0xff]
      %v324 = vld [vmem:[%s2 + $0x8] sm:$0xff]
      %v325 = vld [vmem:[%s2 + $0x10] sm:$0xff]
      %v326 = vld [vmem:[%s2 + $0x18] sm:$0xff]
      %v327 = vld [vmem:[%s2 + $0x20] sm:$0xff]
      %v328 = vld [vmem:[%s2 + $0x28] sm:$0xff]
      %v329 = vld [vmem:[%s2 + $0x30] sm:$0xff]
      %v330 = vld [vmem:[%s2 + $0x38] sm:$0xff]
      %vm331 = vcmask 261120
      %v333 = vsel %vm331, %v315, 0
      %v336 = vsel %vm331, %v316, 0
      %v339 = vsel %vm331, %v317, 0
      %v342 = vsel %vm331, %v318, 0
      %v345 = vsel %vm331, %v319, 0
      %v348 = vsel %vm331, %v320, 0
      %v351 = vsel %vm331, %v321, 0
      %v354 = vsel %vm331, %v322, 0
      %356 = vmatprep.subr.mxu0 %v308
      %357 = vmatpush1.msra.mxu0 %v307
      %358 = vmatprep.subr.mxu0 %v310
      %359 = vmatpush1.msra.mxu0 %v309
      %360 = vmatprep.subr.mxu0 %v312
      %361 = vmatpush1.msra.mxu0 %v311
      %362 = vmatprep.subr.mxu0 %v314
      %363 = vmatpush1.msra.mxu0 %v313
      %364 = vmatprep.subr.mxu0 0.0
      %365 = vmatpush1.msra.mxu0 0.0
      %366 = vmatprep.subr.mxu0 0.0
      %367 = vmatpush1.msra.mxu0 0.0
      %368 = vmatprep.subr.mxu0 0.0
      %369 = vmatpush1.msra.mxu0 0.0
      %370 = vmatprep.subr.mxu0 0.0
      %371 = vmatpush1.msra.mxu0 0.0
      %372 = vmatprep.subr.mxu0 0.0
      %373 = vmatpush1.msra.mxu0 0.0
      %374 = vmatprep.subr.mxu0 0.0
      %375 = vmatpush1.msra.mxu0 0.0
      %376 = vmatprep.subr.mxu0 0.0
      %377 = vmatpush1.msra.mxu0 0.0
      %378 = vmatprep.subr.mxu0 0.0
      %379 = vmatpush1.msra.mxu0 0.0
      %380 = vmatprep.subr.mxu0 0.0
      %381 = vmatpush1.msra.mxu0 0.0
      %382 = vmatprep.subr.mxu0 0.0
      %383 = vmatpush1.msra.mxu0 0.0
      %384 = vmatprep.subr.mxu0 0.0
      %385 = vmatpush1.msra.mxu0 0.0
      %386 = vmatprep.subr.mxu0 0.0
      %387 = vmatpush1.msra.mxu0 0.0
      %388 = vmatprep.subr.mxu0 0.0
      %389 = vmatpush1.msra.mxu0 0.0
      %390 = vmatprep.subr.mxu0 0.0
      %391 = vmatpush1.msra.mxu0 0.0
      %392 = vmatprep.subr.mxu0 0.0
      %393 = vmatpush1.msra.mxu0 0.0
      %394 = vmatprep.subr.mxu0 0.0
      %395 = vmatpush1.msra.mxu0 0.0
      %396 = vmatprep.subr.mxu0 0.0
      %397 = vmatpush1.msra.mxu0 0.0
      %398 = vmatprep.subr.mxu0 0.0
      %399 = vmatpush1.msra.mxu0 0.0
      %400 = vmatprep.subr.mxu0 0.0
      %401 = vmatpush1.msra.mxu0 0.0
      %402 = vmatprep.subr.mxu0 0.0
      %403 = vmatpush1.msra.mxu0 0.0
      %404 = vmatprep.subr.mxu0 0.0
      %405 = vmatpush1.msra.mxu0 0.0
      %406 = vmatprep.subr.mxu0 0.0
      %407 = vmatpush1.msra.mxu0 0.0
      %408 = vmatprep.subr.mxu0 0.0
      %409 = vmatpush1.msra.mxu0 0.0
      %410 = vmatprep.subr.mxu0 0.0
      %411 = vmatpush1.msra.mxu0 0.0
      %412 = vmatprep.subr.mxu0 0.0
      %413 = vmatpush1.msra.mxu0 0.0
      %414 = vmatprep.subr.mxu0 0.0
      %415 = vmatpush1.msra.mxu0 0.0
      %416 = vmatprep.subr.mxu0 0.0
      %417 = vmatpush1.msra.mxu0 0.0
      %418 = vmatprep.subr.mxu0 0.0
      %419 = vmatpush1.msra.mxu0 0.0
      %420 = vmatprep.mubr.f32.mxu0 0.0
      %421 = vmatmul.mubr.f32.gmra.mrb[0].mxu0 %v333
      %v422 = vpop.f32.mrb[0].mxu0
      %v423 = vadd.f32 0.0, %v422
      %v424 = vpop.f32.mrb[0].mxu0
      %v425 = vadd.f32 0.0, %v424
      %426 = vmatprep.mubr.f32.mxu0 0.0
      %427 = vmatmul.mubr.f32.gmra.mrb[0].mxu0 %v336
      %v428 = vpop.f32.mrb[0].mxu0
      %v429 = vadd.f32 0.0, %v428
      %v430 = vpop.f32.mrb[0].mxu0
      %v431 = vadd.f32 0.0, %v430
      %432 = vmatprep.mubr.f32.mxu0 0.0
      %433 = vmatmul.mubr.f32.gmra.mrb[0].mxu0 %v339
      %v434 = vpop.f32.mrb[0].mxu0
      %v435 = vadd.f32 0.0, %v434
      %v436 = vpop.f32.mrb[0].mxu0
      %v437 = vadd.f32 0.0, %v436
      %438 = vmatprep.mubr.f32.mxu0 0.0
      %439 = vmatmul.mubr.f32.gmra.mrb[0].mxu0 %v342
      %v440 = vpop.f32.mrb[0].mxu0
      %v441 = vadd.f32 0.0, %v440
      %v442 = vpop.f32.mrb[0].mxu0
      %v443 = vadd.f32 0.0, %v442
      %444 = vmatprep.mubr.f32.mxu0 0.0
      %445 = vmatmul.mubr.f32.gmra.mrb[0].mxu0 %v345
      %v446 = vpop.f32.mrb[0].mxu0
      %v447 = vadd.f32 0.0, %v446
      %v448 = vpop.f32.mrb[0].mxu0
      %v449 = vadd.f32 0.0, %v448
      %450 = vmatprep.mubr.f32.mxu0 0.0
      %451 = vmatmul.mubr.f32.gmra.mrb[0].mxu0 %v348
      %v452 = vpop.f32.mrb[0].mxu0
      %v453 = vadd.f32 0.0, %v452
      %v454 = vpop.f32.mrb[0].mxu0
      %v455 = vadd.f32 0.0, %v454
      %456 = vmatprep.mubr.f32.mxu0 0.0
      %457 = vmatmul.mubr.f32.gmra.mrb[0].mxu0 %v351
      %v458 = vpop.f32.mrb[0].mxu0
      %v459 = vadd.f32 0.0, %v458
      %v460 = vpop.f32.mrb[0].mxu0
      %v461 = vadd.f32 0.0, %v460
      %462 = vmatprep.mubr.f32.mxu0 0.0
      %463 = vmatmul.mubr.f32.gmra.mrb[0].mxu0 %v354
      %v464 = vpop.f32.mrb[0].mxu0
      %v465 = vadd.f32 0.0, %v464
      %v466 = vpop.f32.mrb[0].mxu0
      %v467 = vadd.f32 0.0, %v466
      %468 = vdwg.mxu0
      %v469 = vmul.f32 %v423, 2.0
      %v470 = vmul.f32 %v425, 2.0
      %v471 = vmul.f32 %v429, 2.0
      %v472 = vmul.f32 %v431, 2.0
      %v473 = vmul.f32 %v435, 2.0
      %v474 = vmul.f32 %v437, 2.0
      %v475 = vmul.f32 %v441, 2.0
      %v476 = vmul.f32 %v443, 2.0
      %v477 = vmul.f32 %v447, 2.0
      %v478 = vmul.f32 %v449, 2.0
      %v479 = vmul.f32 %v453, 2.0
      %v480 = vmul.f32 %v455, 2.0
      %v481 = vmul.f32 %v459, 2.0
      %v482 = vmul.f32 %v461, 2.0
      %v483 = vmul.f32 %v465, 2.0
      %v484 = vmul.f32 %v467, 2.0
      %486 = vset.pattern.permute.xlu0 0
      %487 = vperm.xlu0 %486, %v323
      %v488 = vpop.permute.xlu0 %487
      %491 = vset.pattern.permute.xlu0 0
      %492 = vperm.xlu0 %491, %v324
      %v493 = vpop.permute.xlu0 %492
      %496 = vset.pattern.permute.xlu0 0
      %497 = vperm.xlu0 %496, %v325
      %v498 = vpop.permute.xlu0 %497
      %501 = vset.pattern.permute.xlu0 0
      %502 = vperm.xlu0 %501, %v326
      %v503 = vpop.permute.xlu0 %502
      %506 = vset.pattern.permute.xlu0 0
      %507 = vperm.xlu0 %506, %v327
      %v508 = vpop.permute.xlu0 %507
      %511 = vset.pattern.permute.xlu0 0
      %512 = vperm.xlu0 %511, %v328
      %v513 = vpop.permute.xlu0 %512
      %516 = vset.pattern.permute.xlu0 0
      %517 = vperm.xlu0 %516, %v329
      %v518 = vpop.permute.xlu0 %517
      %521 = vset.pattern.permute.xlu0 0
      %522 = vperm.xlu0 %521, %v330
      %v523 = vpop.permute.xlu0 %522
      %v525 = vsub.f32 %v488, %v469
      %v526 = vsub.f32 %v488, %v470
      %v527 = vsub.f32 %v493, %v471
      %v528 = vsub.f32 %v493, %v472
      %v529 = vsub.f32 %v498, %v473
      %v530 = vsub.f32 %v498, %v474
      %v531 = vsub.f32 %v503, %v475
      %v532 = vsub.f32 %v503, %v476
      %v533 = vsub.f32 %v508, %v477
      %v534 = vsub.f32 %v508, %v478
      %v535 = vsub.f32 %v513, %v479
      %v536 = vsub.f32 %v513, %v480
      %v537 = vsub.f32 %v518, %v481
      %v538 = vsub.f32 %v518, %v482
      %v539 = vsub.f32 %v523, %v483
      %v540 = vsub.f32 %v523, %v484
      %v541 = vmin.f32 %v525, %v529
      %v542 = vmin.f32 %v527, %v531
      %v543 = vmin.f32 %v541, %v533
      %v544 = vmin.f32 %v542, %v535
      %v545 = vmin.f32 %v543, %v537
      %v546 = vmin.f32 %v544, %v539
      %v547 = vmin.f32 %v545, %v546
      %v548 = vrot.slane %v547, 4
      %v549 = vmin.f32 %v547, %v548
      %v550 = vrot.slane %v549, 2
      %v551 = vmin.f32 %v549, %v550
      %v552 = vrot.slane %v551, 1
      %v553 = vmin.f32 %v551, %v552
      %v554 = vmin.f32 %v526, %v530
      %v555 = vmin.f32 %v528, %v532
      %v556 = vmin.f32 %v554, %v534
      %v557 = vmin.f32 %v555, %v536
      %v558 = vmin.f32 %v556, %v538
      %v559 = vmin.f32 %v557, %v540
      %v560 = vmin.f32 %v558, %v559
      %v561 = vrot.slane %v560, 4
      %v562 = vmin.f32 %v560, %v561
      %v563 = vrot.slane %v562, 2
      %v564 = vmin.f32 %v562, %v563
      %v565 = vrot.slane %v564, 1
      %v566 = vmin.f32 %v564, %v565
      %v567 = vlaneseq
      %v568 = vshrl.u32 %v567, 7
      %v569 = vadd.s32 %v568, 8
      %v570 = vadd.s32 %v568, 16
      %v571 = vadd.s32 %v568, 24
      %v572 = vadd.s32 %v568, 32
      %v573 = vadd.s32 %v568, 40
      %v574 = vadd.s32 %v568, 48
      %v575 = vadd.s32 %v568, 56
      %vm576 = vcmp.eq.f32.partialorder %v525, %v553
      %vm577 = vcmp.eq.f32.partialorder %v526, %v566
      %vm578 = vcmp.eq.f32.partialorder %v527, %v553
      %vm579 = vcmp.eq.f32.partialorder %v528, %v566
      %vm580 = vcmp.eq.f32.partialorder %v529, %v553
      %vm581 = vcmp.eq.f32.partialorder %v530, %v566
      %vm582 = vcmp.eq.f32.partialorder %v531, %v553
      %vm583 = vcmp.eq.f32.partialorder %v532, %v566
      %vm584 = vcmp.eq.f32.partialorder %v533, %v553
      %vm585 = vcmp.eq.f32.partialorder %v534, %v566
      %vm586 = vcmp.eq.f32.partialorder %v535, %v553
      %vm587 = vcmp.eq.f32.partialorder %v536, %v566
      %vm588 = vcmp.eq.f32.partialorder %v537, %v553
      %vm589 = vcmp.eq.f32.partialorder %v538, %v566
      %vm590 = vcmp.eq.f32.partialorder %v539, %v553
      %vm591 = vcmp.eq.f32.partialorder %v540, %v566
      %v592 = vsel %vm576, %v568, 64
      %v593 = vsel %vm577, %v568, 64
      %v594 = vsel %vm578, %v569, 64
      %v595 = vsel %vm579, %v569, 64
      %v596 = vsel %vm580, %v570, 64
      %v597 = vsel %vm581, %v570, 64
      %v598 = vsel %vm582, %v571, 64
      %v599 = vsel %vm583, %v571, 64
      %v600 = vsel %vm584, %v572, 64
      %v601 = vsel %vm585, %v572, 64
      %v602 = vsel %vm586, %v573, 64
      %v603 = vsel %vm587, %v573, 64
      %v604 = vsel %vm588, %v574, 64
      %v605 = vsel %vm589, %v574, 64
      %v606 = vsel %vm590, %v575, 64
      %v607 = vsel %vm591, %v575, 64
      %vm608 = vcmp.lt.s32.totalorder %v592, %v596
      %v609 = vsel %vm608, %v592, %v596
      %vm610 = vcmp.lt.s32.totalorder %v594, %v598
      %v611 = vsel %vm610, %v594, %v598
      %vm612 = vcmp.lt.s32.totalorder %v609, %v600
      %v613 = vsel %vm612, %v609, %v600
      %vm614 = vcmp.lt.s32.totalorder %v611, %v602
      %v615 = vsel %vm614, %v611, %v602
      %vm616 = vcmp.lt.s32.totalorder %v613, %v604
      %v617 = vsel %vm616, %v613, %v604
      %vm618 = vcmp.lt.s32.totalorder %v615, %v606
      %v619 = vsel %vm618, %v615, %v606
      %vm620 = vcmp.lt.s32.totalorder %v617, %v619
      %v621 = vsel %vm620, %v617, %v619
      %v622 = vrot.slane %v621, 4
      %vm623 = vcmp.lt.s32.totalorder %v621, %v622
      %v624 = vsel %vm623, %v621, %v622
      %v625 = vrot.slane %v624, 2
      %vm626 = vcmp.lt.s32.totalorder %v624, %v625
      %v627 = vsel %vm626, %v624, %v625
      %v628 = vrot.slane %v627, 1
      %vm629 = vcmp.lt.s32.totalorder %v627, %v628
      %v630 = vsel %vm629, %v627, %v628
      %vm631 = vcmp.lt.s32.totalorder %v593, %v597
      %v632 = vsel %vm631, %v593, %v597
      %vm633 = vcmp.lt.s32.totalorder %v595, %v599
      %v634 = vsel %vm633, %v595, %v599
      %vm635 = vcmp.lt.s32.totalorder %v632, %v601
      %v636 = vsel %vm635, %v632, %v601
      %vm637 = vcmp.lt.s32.totalorder %v634, %v603
      %v638 = vsel %vm637, %v634, %v603
      %vm639 = vcmp.lt.s32.totalorder %v636, %v605
      %v640 = vsel %vm639, %v636, %v605
      %vm641 = vcmp.lt.s32.totalorder %v638, %v607
      %v642 = vsel %vm641, %v638, %v607
      %vm643 = vcmp.lt.s32.totalorder %v640, %v642
      %v644 = vsel %vm643, %v640, %v642
      %v645 = vrot.slane %v644, 4
      %vm646 = vcmp.lt.s32.totalorder %v644, %v645
      %v647 = vsel %vm646, %v644, %v645
      %v648 = vrot.slane %v647, 2
      %vm649 = vcmp.lt.s32.totalorder %v647, %v648
      %v650 = vsel %vm649, %v647, %v648
      %v651 = vrot.slane %v650, 1
      %vm652 = vcmp.lt.s32.totalorder %v650, %v651
      %v653 = vsel %vm652, %v650, %v651
      %vm654 = vcmp.eq.s32.totalorder %v568, %v630
      %vm655 = vcmp.eq.s32.totalorder %v568, %v653
      %vm656 = vcmp.eq.s32.totalorder %v569, %v630
      %vm657 = vcmp.eq.s32.totalorder %v569, %v653
      %vm658 = vcmp.eq.s32.totalorder %v570, %v630
      %vm659 = vcmp.eq.s32.totalorder %v570, %v653
      %vm660 = vcmp.eq.s32.totalorder %v571, %v630
      %vm661 = vcmp.eq.s32.totalorder %v571, %v653
      %vm662 = vcmp.eq.s32.totalorder %v572, %v630
      %vm663 = vcmp.eq.s32.totalorder %v572, %v653
      %vm664 = vcmp.eq.s32.totalorder %v573, %v630
      %vm665 = vcmp.eq.s32.totalorder %v573, %v653
      %vm666 = vcmp.eq.s32.totalorder %v574, %v630
      %vm667 = vcmp.eq.s32.totalorder %v574, %v653
      %vm668 = vcmp.eq.s32.totalorder %v575, %v630
      %vm669 = vcmp.eq.s32.totalorder %v575, %v653
      %v670 = vsel %vm654, 1, 0
      %v671 = vsel %vm655, 1, 0
      %v672 = vsel %vm656, 1, 0
      %v673 = vsel %vm657, 1, 0
      %v674 = vsel %vm658, 1, 0
      %v675 = vsel %vm659, 1, 0
      %v676 = vsel %vm660, 1, 0
      %v677 = vsel %vm661, 1, 0
      %v678 = vsel %vm662, 1, 0
      %v679 = vsel %vm663, 1, 0
      %v680 = vsel %vm664, 1, 0
      %v681 = vsel %vm665, 1, 0
      %v682 = vsel %vm666, 1, 0
      %v683 = vsel %vm667, 1, 0
      %v684 = vsel %vm668, 1, 0
      %v685 = vsel %vm669, 1, 0
      %v686 = vcvt.s32.f32 %v670
      %v687 = vcvt.s32.f32 %v671
      %v688 = vcvt.s32.f32 %v672
      %v689 = vcvt.s32.f32 %v673
      %v690 = vcvt.s32.f32 %v674
      %v691 = vcvt.s32.f32 %v675
      %v692 = vcvt.s32.f32 %v676
      %v693 = vcvt.s32.f32 %v677
      %v694 = vcvt.s32.f32 %v678
      %v695 = vcvt.s32.f32 %v679
      %v696 = vcvt.s32.f32 %v680
      %v697 = vcvt.s32.f32 %v681
      %v698 = vcvt.s32.f32 %v682
      %v699 = vcvt.s32.f32 %v683
      %v700 = vcvt.s32.f32 %v684
      %v701 = vcvt.s32.f32 %v685
      %702 = vxpose.xlu0.b32.start [1/16] %v315, 128
      %703 = vxpose.xlu0.b32.cont [2/16] %v316, 128
      %704 = vxpose.xlu0.b32.cont [3/16] %v317, 128
      %705 = vxpose.xlu0.b32.cont [4/16] %v318, 128
      %706 = vxpose.xlu0.b32.cont [5/16] %v319, 128
      %707 = vxpose.xlu0.b32.cont [6/16] %v320, 128
      %708 = vxpose.xlu0.b32.cont [7/16] %v321, 128
      %709 = vxpose.xlu0.b32.cont [8/16] %v322, 128
      %710 = vxpose.xlu0.b32.cont [9/16] 0.0, 128
      %711 = vxpose.xlu0.b32.cont [10/16] 0.0, 128
      %712 = vxpose.xlu0.b32.cont [11/16] 0.0, 128
      %713 = vxpose.xlu0.b32.cont [12/16] 0.0, 128
      %714 = vxpose.xlu0.b32.cont [13/16] 0.0, 128
      %715 = vxpose.xlu0.b32.cont [14/16] 0.0, 128
      %716 = vxpose.xlu0.b32.cont [15/16] 0.0, 128
      %717 = vxpose.xlu0.b32.end [16/16] 0.0, 128
      %v718 = vpop.trf.xlu0
      %v719 = vpop.trf.xlu0
      %v720 = vpop.trf.xlu0
      %v721 = vpop.trf.xlu0
      %v722 = vpop.trf.xlu0
      %v723 = vpop.trf.xlu0
      %v724 = vpop.trf.xlu0
      %v725 = vpop.trf.xlu0
      %v726 = vpop.trf.xlu0
      %v727 = vpop.trf.xlu0
      %v728 = vpop.trf.xlu0
      %v729 = vpop.trf.xlu0
      %v730 = vpop.trf.xlu0
      %v731 = vpop.trf.xlu0
      %v732 = vpop.trf.xlu0
      %v733 = vpop.trf.xlu0
      %vm734 = vcmask 523264
      %v736 = vsel %vm734, %v718, 0
      %v739 = vsel %vm734, %v719, 0
      %v742 = vsel %vm734, %v720, 0
      %v745 = vsel %vm734, %v721, 0
      %747 = vmatprep.subr.mxu0 %v687
      %748 = vmatpush1.msra.mxu0 %v686
      %749 = vmatprep.subr.mxu0 %v689
      %750 = vmatpush1.msra.mxu0 %v688
      %751 = vmatprep.subr.mxu0 %v691
      %752 = vmatpush1.msra.mxu0 %v690
      %753 = vmatprep.subr.mxu0 %v693
      %754 = vmatpush1.msra.mxu0 %v692
      %755 = vmatprep.subr.mxu0 %v695
      %756 = vmatpush1.msra.mxu0 %v694
      %757 = vmatprep.subr.mxu0 %v697
      %758 = vmatpush1.msra.mxu0 %v696
      %759 = vmatprep.subr.mxu0 %v699
      %760 = vmatpush1.msra.mxu0 %v698
      %761 = vmatprep.subr.mxu0 %v701
      %762 = vmatpush1.msra.mxu0 %v700
      %763 = vmatprep.subr.mxu0 0.0
      %764 = vmatpush1.msra.mxu0 0.0
      %765 = vmatprep.subr.mxu0 0.0
      %766 = vmatpush1.msra.mxu0 0.0
      %767 = vmatprep.subr.mxu0 0.0
      %768 = vmatpush1.msra.mxu0 0.0
      %769 = vmatprep.subr.mxu0 0.0
      %770 = vmatpush1.msra.mxu0 0.0
      %771 = vmatprep.subr.mxu0 0.0
      %772 = vmatpush1.msra.mxu0 0.0
      %773 = vmatprep.subr.mxu0 0.0
      %774 = vmatpush1.msra.mxu0 0.0
      %775 = vmatprep.subr.mxu0 0.0
      %776 = vmatpush1.msra.mxu0 0.0
      %777 = vmatprep.subr.mxu0 0.0
      %778 = vmatpush1.msra.mxu0 0.0
      %779 = vmatprep.subr.mxu0 0.0
      %780 = vmatpush1.msra.mxu0 0.0
      %781 = vmatprep.subr.mxu0 0.0
      %782 = vmatpush1.msra.mxu0 0.0
      %783 = vmatprep.subr.mxu0 0.0
      %784 = vmatpush1.msra.mxu0 0.0
      %785 = vmatprep.subr.mxu0 0.0
      %786 = vmatpush1.msra.mxu0 0.0
      %787 = vmatprep.subr.mxu0 0.0
      %788 = vmatpush1.msra.mxu0 0.0
      %789 = vmatprep.subr.mxu0 0.0
      %790 = vmatpush1.msra.mxu0 0.0
      %791 = vmatprep.subr.mxu0 0.0
      %792 = vmatpush1.msra.mxu0 0.0
      %793 = vmatprep.subr.mxu0 0.0
      %794 = vmatpush1.msra.mxu0 0.0
      %795 = vmatprep.subr.mxu0 0.0
      %796 = vmatpush1.msra.mxu0 0.0
      %797 = vmatprep.subr.mxu0 0.0
      %798 = vmatpush1.msra.mxu0 0.0
      %799 = vmatprep.subr.mxu0 0.0
      %800 = vmatpush1.msra.mxu0 0.0
      %801 = vmatprep.subr.mxu0 0.0
      %802 = vmatpush1.msra.mxu0 0.0
      %803 = vmatprep.subr.mxu0 0.0
      %804 = vmatpush1.msra.mxu0 0.0
      %805 = vmatprep.subr.mxu0 0.0
      %806 = vmatpush1.msra.mxu0 0.0
      %807 = vmatprep.subr.mxu0 0.0
      %808 = vmatpush1.msra.mxu0 0.0
      %809 = vmatprep.subr.mxu0 0.0
      %810 = vmatpush1.msra.mxu0 0.0
      %811 = vmatprep.mubr.f32.mxu0 0.0
      %812 = vmatmul.mubr.f32.gmra.mrb[0].mxu0 %v736
      %v813 = vpop.f32.mrb[0].mxu0
      %v814 = vadd.f32 0.0, %v813
      %v815 = vpop.f32.mrb[0].mxu0
      %v816 = vadd.f32 0.0, %v815
      %817 = vmatprep.mubr.f32.mxu0 0.0
      %818 = vmatmul.mubr.f32.gmra.mrb[0].mxu0 %v739
      %v819 = vpop.f32.mrb[0].mxu0
      %v820 = vadd.f32 0.0, %v819
      %v821 = vpop.f32.mrb[0].mxu0
      %v822 = vadd.f32 0.0, %v821
      %823 = vmatprep.mubr.f32.mxu0 0.0
      %824 = vmatmul.mubr.f32.gmra.mrb[0].mxu0 %v742
      %v825 = vpop.f32.mrb[0].mxu0
      %v826 = vadd.f32 0.0, %v825
      %v827 = vpop.f32.mrb[0].mxu0
      %v828 = vadd.f32 0.0, %v827
      %829 = vmatprep.mubr.f32.mxu0 0.0
      %830 = vmatmul.mubr.f32.gmra.mrb[0].mxu0 %v745
      %v831 = vpop.f32.mrb[0].mxu0
      %v832 = vadd.f32 0.0, %v831
      %v833 = vpop.f32.mrb[0].mxu0
      %v834 = vadd.f32 0.0, %v833
      %835 = vdwg.mxu0
      %836 = vst [vmem:[%s287] sm:$0xff] %v814
      %837 = vst [vmem:[%s287 + $0x8] sm:$0xff] %v816
      %838 = vst [vmem:[%s287 + $0x10] sm:$0xff] %v820
      %839 = vst [vmem:[%s287 + $0x18] sm:$0xff] %v822
      %840 = vst [vmem:[%s287 + $0x20] sm:$0xff] %v826
      %841 = vst [vmem:[%s287 + $0x28] sm:$0xff] %v828
      %842 = vst [vmem:[%s287 + $0x30] sm:$0xff] %v832
      %843 = vst [vmem:[%s287 + $0x38] sm:$0xff] %v834
      %v844 = vcombine.low %v630, %v653
      %v846 = vunpack.c.l.s4 1966171168
      %v847 = vunpack.c.0.s8 %v846
      %v848 = vlaneseq
      %v849 = vshrl.u32 %v848, 7
      %v850 = vsub.s32 %v847, %v849
      %v851 = vrot.slane %v844, %v850
      %v853 = vunpack.c.l.s4 1966171168
      %v854 = vunpack.c.0.s8 %v853
      %v855 = vlaneseq
      %v856 = vshrl.u32 %v855, 7
      %v857 = vsub.s32 %v854, %v856
      %v858 = vrot.slane %v851, %v857
      %v859 = vlaneseq
      %vm860 = vcmp.ge.s32.totalorder %v859, 0
      %vm861 = vcmp.lt.s32.totalorder %v859, 256
      %vm862 = vmand %vm860, %vm861
      %863 = vst.msk [vmem:[%s296] sm:$0x3] %vm862, %v858
      %v864 = vsub.f32 %v814, %v307
      %v865 = vsub.f32 %v816, %v308
      %v866 = vsub.f32 %v820, %v309
      %v867 = vsub.f32 %v822, %v310
      %v868 = vsub.f32 %v826, %v311
      %v869 = vsub.f32 %v828, %v312
      %v870 = vsub.f32 %v832, %v313
      %v871 = vsub.f32 %v834, %v314
      %v872 = vmul.f32 %v864, %v864
      %v873 = vmul.f32 %v865, %v865
      %v874 = vmul.f32 %v866, %v866
      %v875 = vmul.f32 %v867, %v867
      %v876 = vmul.f32 %v868, %v868
      %v877 = vmul.f32 %v869, %v869
      %v878 = vmul.f32 %v870, %v870
      %v879 = vmul.f32 %v871, %v871
      %v880 = vadd.f32 %v872, %v874
      %v881 = vadd.f32 %v880, %v876
      %v882 = vadd.f32 %v881, %v878
      %v883 = vrot.slane %v882, 4
      %v884 = vadd.f32 %v882, %v883
      %v885 = vrot.slane %v884, 2
      %v886 = vadd.f32 %v884, %v885
      %v887 = vrot.slane %v886, 1
      %v888 = vadd.f32 %v886, %v887
      %v889 = vadd.f32 %v873, %v875
      %v890 = vadd.f32 %v889, %v877
      %v891 = vadd.f32 %v890, %v879
      %v892 = vrot.slane %v891, 4
      %v893 = vadd.f32 %v891, %v892
      %v894 = vrot.slane %v893, 2
      %v895 = vadd.f32 %v893, %v894
      %v896 = vrot.slane %v895, 1
      %v897 = vadd.f32 %v895, %v896
      %v900 = vcombine.low %v888, %v897
      %v902 = vunpack.c.l.s4 1966171168
      %v903 = vunpack.c.0.s8 %v902
      %v904 = vlaneseq
      %v905 = vshrl.u32 %v904, 7
      %v906 = vsub.s32 %v903, %v905
      %v907 = vrot.slane %v900, %v906
      %v909 = vunpack.c.l.s4 1966171168
      %v910 = vunpack.c.0.s8 %v909
      %v911 = vlaneseq
      %v912 = vshrl.u32 %v911, 7
      %v913 = vsub.s32 %v910, %v912
      %v914 = vrot.slane %v907, %v913
      %916 = vst.msk [vmem:[%s305] sm:$0x3] %vm862, %v914
      %s917 = smul.u32 2, %s22
      %p918 = scmp.lt.s32.totalorder %s21, 1
      %s919 = scalar_select %p918, %s21, 1
      %p920 = scmp.lt.s32.totalorder %s917, 1
      %s921 = scalar_select %p920, %s917, 1
      %s922 = smul.addr %s919, 8
      %s923 = sadd.s32 %s921, %s922
      %s924 = smul.addr %s923, 8
      %s925 = scalar_lea.vmem %s3, %s924
      %s926 = smul.u32 2, %s22
      %p927 = scmp.lt.s32.totalorder %s21, 1
      %s928 = scalar_select %p927, %s21, 1
      %p929 = scmp.lt.s32.totalorder %s926, 1
      %s930 = scalar_select %p929, %s926, 1
      %s931 = smul.addr %s928, 2
      %s932 = sadd.s32 %s930, %s931
      %s933 = scalar_lea.vmem %s4, %s932
      %s934 = smul.u32 2, %s22
      %p935 = scmp.lt.s32.totalorder %s21, 1
      %s936 = scalar_select %p935, %s21, 1
      %p937 = scmp.lt.s32.totalorder %s934, 1
      %s938 = scalar_select %p937, %s934, 1
      %s939 = smul.addr %s936, 2
      %s940 = sadd.s32 %s938, %s939
      %s941 = scalar_lea.vmem %s5, %s940
      // Predicated region
      $region33: #{quantizer_forward.1} parent=31 // pred_check
        %p942 = pneg %p119
      $region34: #{quantizer_forward.1} parent=31 // pred_check_branch
        %944 = sbr.rel (%p942) target = $region36
      $region35: #{quantizer_forward.1} parent=31 // pred_region
        %s945 = smul.u32 2, %s22
      $region36: #{quantizer_forward.1} parent=31 // pred_fallthru
        _
      // Predicated region
      $region37: #{quantizer_forward.1} parent=31 // pred_check
        %p946 = pneg %p147
      $region38: #{quantizer_forward.1} parent=31 // pred_check_branch
        %948 = sbr.rel (%p946) target = $region40
      $region39: #{quantizer_forward.1} parent=31 // pred_region
        %s949 = smul.u32 2, %s22
      $region40: #{quantizer_forward.1} parent=31 // pred_fallthru
        _
      // Predicated region
      $region41: #{quantizer_forward.1} parent=31 // pred_check
        %p950 = pneg %p175
      $region42: #{quantizer_forward.1} parent=31 // pred_check_branch
        %952 = sbr.rel (%p950) target = $region44
      $region43: #{quantizer_forward.1} parent=31 // pred_region
        %s953 = smul.u32 2, %s22
      $region44: #{quantizer_forward.1} parent=31 // pred_fallthru
        _
    $region32: #{quantizer_forward.1} parent=5 // pred_fallthru
      _
    %p954 = scmp.le.s32.totalorder 2, %s12
    // Predicated region
    $region45: #{quantizer_forward.1} parent=5 // pred_check
      %p955 = pneg %p954
    $region46: #{quantizer_forward.1} parent=5 // pred_check_branch
      %957 = sbr.rel (%p955) target = $region48
    $region47: #{quantizer_forward.1} parent=5 // pred_region
      %s958 = ssub.s32 %s12, 2
      // Predicated region
      $region49: #{quantizer_forward.1} parent=47 // pred_check
        %p959 = pneg %p125
      $region50: #{quantizer_forward.1} parent=47 // pred_check_branch
        %961 = sbr.rel (%p959) target = $region52
      $region51: #{quantizer_forward.1} parent=47 // pred_region
        %s962 = smul.u32 2, %s24
        %p963 = scmp.lt.s32.totalorder %s23, 1
        %s964 = scalar_select %p963, %s23, 1
        %p965 = scmp.lt.s32.totalorder %s962, 1
        %s966 = scalar_select %p965, %s962, 1
        %s967 = smul.addr %s964, 8
        %s968 = sadd.s32 %s966, %s967
        %s969 = smul.addr %s968, 8
        %s970 = scalar_lea.vmem %s3, %s969
      $region52: #{quantizer_forward.1} parent=47 // pred_fallthru
        _
      // Predicated region
      $region53: #{quantizer_forward.1} parent=47 // pred_check
        %p971 = pneg %p153
      $region54: #{quantizer_forward.1} parent=47 // pred_check_branch
        %973 = sbr.rel (%p971) target = $region56
      $region55: #{quantizer_forward.1} parent=47 // pred_region
        %s974 = smul.u32 2, %s24
        %p975 = scmp.lt.s32.totalorder %s23, 1
        %s976 = scalar_select %p975, %s23, 1
        %p977 = scmp.lt.s32.totalorder %s974, 1
        %s978 = scalar_select %p977, %s974, 1
        %s979 = smul.addr %s976, 2
        %s980 = sadd.s32 %s978, %s979
        %s981 = scalar_lea.vmem %s4, %s980
      $region56: #{quantizer_forward.1} parent=47 // pred_fallthru
        _
      // Predicated region
      $region57: #{quantizer_forward.1} parent=47 // pred_check
        %p982 = pneg %p181
      $region58: #{quantizer_forward.1} parent=47 // pred_check_branch
        %984 = sbr.rel (%p982) target = $region60
      $region59: #{quantizer_forward.1} parent=47 // pred_region
        %s985 = smul.u32 2, %s24
        %p986 = scmp.lt.s32.totalorder %s23, 1
        %s987 = scalar_select %p986, %s23, 1
        %p988 = scmp.lt.s32.totalorder %s985, 1
        %s989 = scalar_select %p988, %s985, 1
        %s990 = smul.addr %s987, 2
        %s991 = sadd.s32 %s989, %s990
        %s992 = scalar_lea.vmem %s5, %s991
      $region60: #{quantizer_forward.1} parent=47 // pred_fallthru
        _
    $region48: #{quantizer_forward.1} parent=5 // pred_fallthru
      _
  $region6: #{quantizer_forward.1} parent=0 // loop_footer
    %s16 = sadd.s32 1, %s12
  $region7: #{quantizer_forward.1} parent=0 // loop_footer_branch
    %11 = sbr.rel target = $region3
  $region8: #{quantizer_forward.1} parent=0 // loop_exit
    _

</llo_original>
